<compile_context>
chip_gen: v5e
topology: v5e:2x2
jax: 0.10.0
libtpu: 0.0.40
codegen_flags: <defaults>
</compile_context>

<pallas_src>
import functools

import numpy as np

import jax
import jax.numpy as jnp
from jax.experimental import pallas as pl
from jax.experimental.pallas import tpu as pltpu


def _round_up(x, m):
    return (x + m - 1) // m * m


def _choose_row_tiling(R, bytes_per_row):
    """Pick (R_pad, TR) with TR | R_pad and (TR % 8 == 0 or TR == R_pad).

    Targets ~2 MiB output tiles and, when the batch is large enough, >= 2-4
    grid steps so the "parallel" axis can shard across v7x's two TensorCores.
    """
    if R < 8:
        return R, R                       # one small block; block == full dim is legal
    target = max(8, (2 << 20) // max(1, bytes_per_row))
    if R >= 32:
        target = min(target, max(8, (R // 4) // 8 * 8))   # >= 4 steps
    elif R >= 16:
        target = min(target, max(8, (R // 2) // 8 * 8))   # >= 2 steps
    best = 0
    tr = 8
    while tr <= min(target, R):
        if R % tr == 0:
            best = tr
        tr += 8
    if best:
        return R, best
    # No multiple-of-8 divisor <= target: pad R to a multiple of 8 and tile by 8
    # (the few extra rows are trimmed by the wrapper's final slice).
    return _round_up(R, 8), 8


def _linear_matrix_kernel(omega_ref, out_ref, *, dim):
    """out[r, c, j] = omega[r, c] * sign(j),  sign synthesized from a lane iota.

    omega_ref : VMEM (TR, 128)        -- 128 batch elements per sublane row (lane-dense)
    out_ref   : VMEM (TR, 128, L_pad) -- lane-dense output tile (full-width vst)
    """
    l_pad = out_ref.shape[-1]
    mat = dim * dim
    lane = jax.lax.broadcasted_iota(jnp.int32, (1, 1, l_pad), dimension=2)
    if (mat & (mat - 1)) == 0:            # power-of-two dim*dim -> bitwise and
        m = lane & (mat - 1)
    else:
        m = lane % mat                    # general dim: i32 remainder on the VPU
    # +1 at within-matrix index (0,1) -> m == 1 ; -1 at (1,0) -> m == dim ; else 0.
    sign = (m == 1).astype(out_ref.dtype) - (m == dim).astype(out_ref.dtype)
    out_ref[...] = omega_ref[...][..., None] * sign


def _linear_matrix_pallas(omega, t, dim):
    if dim < 2:
        raise ValueError("dim must be >= 2 (module writes A[...,0,1] and A[...,1,0])")
    batch_shape = omega.shape[:-1]
    B = int(np.prod(batch_shape)) if batch_shape else 1
    dtype = omega.dtype
    # NOTE: output could be emitted as bf16 (halves write traffic, values are
    # exactly +/-omega and 0) if the consumer tolerates it; kept f32 to match
    # the module exactly.

    t = jnp.asarray(t)
    t_is_vec = (t.ndim == 1)
    T = int(t.shape[0]) if t_is_vec else 1
    L = T * dim * dim
    L_pad = _round_up(L, 128)             # lane-dense output (unmasked full-width stores)

    FOLD = 128                            # batch elements folded into omega's lane axis
    R = _round_up(B, FOLD) // FOLD
    itemsize = jnp.dtype(dtype).itemsize
    R_pad, TR = _choose_row_tiling(R, FOLD * L_pad * itemsize)

    # omega, lane-dense: (R_pad, 128). Padded entries produce zero rows that are sliced off.
    omega_flat = omega.reshape(-1)
    pad = R_pad * FOLD - B
    if pad:
        omega_flat = jnp.pad(omega_flat, (0, pad))
    omega2d = omega_flat.reshape(R_pad, FOLD)

    out3d = pl.pallas_call(
        functools.partial(_linear_matrix_kernel, dim=dim),
        out_shape=jax.ShapeDtypeStruct((R_pad, FOLD, L_pad), dtype),
        grid=(R_pad // TR,),
        in_specs=[pl.BlockSpec((TR, FOLD), lambda r: (r, 0))],
        out_specs=pl.BlockSpec((TR, FOLD, L_pad), lambda r: (r, 0, 0)),
        compiler_params=pltpu.CompilerParams(
            dimension_semantics=("parallel",),     # batch tiles independent (v7x: 2 TCs)
            vmem_limit_bytes=32 << 20),            # headroom; tiles are a few MiB max
    )(omega2d)

    flat = out3d.reshape(R_pad * FOLD, L_pad)      # pure reshape (row-major compatible)
    if L_pad != L:
        flat = flat[:, :L]                         # only when T*dim*dim % 128 != 0
    if R_pad * FOLD != B:
        flat = flat[:B]                            # only when B % 128 != 0

    if t_is_vec:
        return flat.reshape(*batch_shape, T, dim, dim)
    return flat.reshape(*batch_shape, dim, dim)


def _linear_matrix_jnp(omega, t, dim):
    """Pure-JAX fast path; XLA fuses it. Strictly faster for tiny B*T*dim*dim."""
    batch_shape = omega.shape[:-1]
    A = jnp.zeros((*batch_shape, dim, dim), omega.dtype)
    A = A.at[..., 0, 1].set(omega[..., 0])
    A = A.at[..., 1, 0].set(-omega[..., 0])
    t = jnp.asarray(t)
    if t.ndim == 1:
        return jnp.broadcast_to(A[..., None, :, :],
                                (*batch_shape, t.shape[0], dim, dim))
    return A


def linear_matrix_forward(omega, t, dim, *, force_pallas=False):
    """Pallas equivalent of LinearMatrixModule.forward(t)."""
    # TODO(synk): the biggest win is structural -- fuse this construction into the
    # consumer of A (87.5% of written bytes are zeros at dim=4); kept standalone per spec.
    batch_shape = omega.shape[:-1]
    B = int(np.prod(batch_shape)) if batch_shape else 1
    t_arr = jnp.asarray(t)
    T = int(t_arr.shape[0]) if t_arr.ndim == 1 else 1
    if not force_pallas and B * T * dim * dim <= (1 << 14):
        return _linear_matrix_jnp(omega, t, dim)   # pallas_call overhead would dominate
    return _linear_matrix_pallas(omega, t, dim)


def linear_matrix_reference(omega, t, dim):
    """Pure-JAX reference mirroring the PyTorch module exactly."""
    batch_shape = omega.shape[:-1]
    A = jnp.zeros((*batch_shape, dim, dim), omega.dtype)
    A = A.at[..., 0, 1].set(omega[..., 0])
    A = A.at[..., 1, 0].set(-omega[..., 0])
    t = jnp.asarray(t)
    if t.ndim == 1:
        return jnp.broadcast_to(A[..., None, :, :],
                                (*batch_shape, t.shape[0], dim, dim))
    return A


if __name__ == "__main__":
    # Module config: dim=4, batch_shape=(2,)
    dim = 4
    batch_shape = (2,)
    T = 8

    key = jax.random.PRNGKey(0)
    # Deterministic parameter init (stands in for nn.Parameter(torch.randn(..., 1)))
    omega = jax.random.normal(key, (*batch_shape, 1), dtype=jnp.float32)

    # Case 1: t is a 1-D tensor -> expanded output (*batch_shape, T, dim, dim)
    t_vec = jnp.linspace(0.0, 1.0, T, dtype=jnp.float32)
    out_vec = jax.block_until_ready(linear_matrix_forward(omega, t_vec, dim,
                                                          force_pallas=True))
    ref_vec = linear_matrix_reference(omega, t_vec, dim)
    assert out_vec.shape == (*batch_shape, T, dim, dim)
    np.testing.assert_allclose(np.asarray(out_vec), np.asarray(ref_vec),
                               rtol=0, atol=0)

    # Case 2: t is a scalar -> output (*batch_shape, dim, dim)
    t_scalar = jnp.float32(0.5)
    out_sc = jax.block_until_ready(linear_matrix_forward(omega, t_scalar, dim,
                                                         force_pallas=True))
    ref_sc = linear_matrix_reference(omega, t_scalar, dim)
    assert out_sc.shape == (*batch_shape, dim, dim)
    np.testing.assert_allclose(np.asarray(out_sc), np.asarray(ref_sc),
                               rtol=0, atol=0)

    # Case 3: default dispatch (small-size pure-jnp branch) must agree too.
    out_disp = jax.block_until_ready(linear_matrix_forward(omega, t_vec, dim))
    np.testing.assert_allclose(np.asarray(out_disp), np.asarray(ref_vec),
                               rtol=0, atol=0)

    print("KERNEL_OK")
</pallas_src>

<mosaic_0001>
module attributes {stable_mosaic.version = 11 : i64} {
  func.func @_linear_matrix_kernel(%arg0: i32, %arg1: memref<1x128xf32, #tpu.memory_space<vmem>>, %arg2: memref<1x128x128xf32, #tpu.memory_space<vmem>>) attributes {dimension_semantics = [#tpu.dimension_semantics<parallel>], iteration_bounds = array<i64: 1>, scalar_prefetch = 0 : i64, scratch_operands = 0 : i64, tpu.core_type = #tpu.core_type<tc>, window_params = [{transform_indices = @transform_0, window_bounds = array<i64: 1, 128>}, {transform_indices = @transform_1, window_bounds = array<i64: 1, 128, 128>}]} {
    %0 = tpu.iota {dimensions = array<i32: 2>} : vector<1x1x128xi32>
    %c15_i32 = arith.constant 15 : i32
    %1 = vector.broadcast %c15_i32 : i32 to vector<1x1x128xi32>
    %2 = arith.andi %0, %1 : vector<1x1x128xi32>
    %c1_i32 = arith.constant 1 : i32
    %3 = vector.broadcast %c1_i32 : i32 to vector<1x1x128xi32>
    %4 = arith.cmpi eq, %2, %3 : vector<1x1x128xi32>
    %5 = arith.extui %4 : vector<1x1x128xi1> to vector<1x1x128xi32>
    %6 = arith.sitofp %5 : vector<1x1x128xi32> to vector<1x1x128xf32>
    %c4_i32 = arith.constant 4 : i32
    %7 = vector.broadcast %c4_i32 : i32 to vector<1x1x128xi32>
    %8 = arith.cmpi eq, %2, %7 : vector<1x1x128xi32>
    %9 = arith.extui %8 : vector<1x1x128xi1> to vector<1x1x128xi32>
    %10 = arith.sitofp %9 : vector<1x1x128xi32> to vector<1x1x128xf32>
    %11 = arith.subf %6, %10 : vector<1x1x128xf32>
    %c0 = arith.constant 0 : index
    %c0_0 = arith.constant 0 : index
    %12 = vector.load %arg1[%c0, %c0_0] : memref<1x128xf32, #tpu.memory_space<vmem>>, vector<1x128xf32>
    %13 = vector.shape_cast %12 : vector<1x128xf32> to vector<1x128x1xf32>
    %14 = vector.broadcast %13 : vector<1x128x1xf32> to vector<1x128x128xf32>
    %15 = vector.broadcast %11 : vector<1x1x128xf32> to vector<1x128x128xf32>
    %16 = arith.mulf %14, %15 : vector<1x128x128xf32>
    %c0_1 = arith.constant 0 : index
    %c0_2 = arith.constant 0 : index
    %c0_3 = arith.constant 0 : index
    %17 = vector.load %arg2[%c0_1, %c0_2, %c0_3] : memref<1x128x128xf32, #tpu.memory_space<vmem>>, vector<1x128x128xf32>
    tpu.vector_store %arg2[%c0_1, %c0_2, %c0_3], %16 {strides = array<i32>} : memref<1x128x128xf32, #tpu.memory_space<vmem>>, vector<1x128x128xf32>,
    return
  }
  func.func @transform_0(%arg0: i32) -> (i32, i32) {
    %c0_i32 = arith.constant 0 : i32
    %c0_i32_0 = arith.constant 0 : i32
    return %arg0, %c0_i32 : i32, i32
  }
  func.func @transform_1(%arg0: i32) -> (i32, i32, i32) {
    %c0_i32 = arith.constant 0 : i32
    %c0_i32_0 = arith.constant 0 : i32
    %c0_i32_1 = arith.constant 0 : i32
    return %arg0, %c0_i32, %c0_i32_0 : i32, i32, i32
  }
}

</mosaic_0001>

<llo_original>
// kernel: tpu_custom_call.1
$region0: #{tpu_custom_call.1}
  #allocation0 [shape = 'u32[]', space=smem, size = 0x4, offset = 0x4, fixed_abs, tag = 'smem constant byte address 0x4 - core index']
  #allocation1 [shape = 'u32[72,128]{1,0:T(1,128)}', space=vmem, size = 0x9000, scoped, tag = 'internal scratch']
  %s0 = inlined_call_operand.hbm [shape: f32[1,128], index: 0, kind: input, shape index: {}]
  %s1 = inlined_call_operand.hbm [shape: f32[1,128,128], index: 1, kind: output, shape index: {}]
  %s2 = sld [smem:[#allocation0]]
  $region18: #{tpu_custom_call.1} parent=0
    _
  %s4 = ssub.s32 1, %s2
  %s5 = scalar_select 0, %s4, %s2
  $region1: #{tpu_custom_call.1} parent=0
    #allocation2 [shape = 'u8[512]{0}', space=vmem, size = 0x400, scoped, tag = 'input window, operand 0, single buffered']
    #allocation3 [shape = 's32[1]{0}', space=sflag, size = 0x4, scoped, tag = 'scoped memory for tpu_custom_call.1']
    #allocation4 [shape = 's32[1]{0}', space=sflag, size = 0x4, scoped, tag = 'scoped memory for tpu_custom_call.1']
    #allocation5 [shape = 'u8[65536]{0}', space=vmem, size = 0x10000, scoped, tag = 'output window, operand 0, single buffered']
    %6 = vsyncpa [#allocation3], 0
    %7 = vsyncpa [#allocation4], 0
    // Predicated region
    $region2: #{tpu_custom_call.1} parent=1 // pred_check
      _
    $region3: #{tpu_custom_call.1} parent=1 // pred_check_branch
      %9 = sbr.rel (0) target = $region5
    $region4: #{tpu_custom_call.1} parent=1 // pred_region
      %11 = vsyncadd [#allocation3], 0
      %s13 = sshll.u32 %s0, 4
      %s14 = int_to_ptr.hbm [resolvable:$true] %s13
      %s15 = sshll.u32 [#allocation2], 4
      %s16 = int_to_ptr.vmem [resolvable:$true] %s15
      %18 = dma.hbm_to_vmem [thread:$0]  %s14, 16, %s16, [#allocation3]
    $region5: #{tpu_custom_call.1} parent=1 // pred_fallthru
      _
    // Predicated region
    $region6: #{tpu_custom_call.1} parent=1 // pred_check
      _
    $region7: #{tpu_custom_call.1} parent=1 // pred_check_branch
      %20 = sbr.rel (0) target = $region9
    $region8: #{tpu_custom_call.1} parent=1 // pred_region
      %22 = dma.done [#allocation3], 16
    $region9: #{tpu_custom_call.1} parent=1 // pred_fallthru
      _
    %v23 = vlaneseq
    %v24 = vand.u32 %v23, 127
    %v25 = vand.u32 %v24, 15
    %vm26 = vcmp.eq.s32.totalorder %v25, 1
    %v27 = vsel %vm26, 1, 0
    %v28 = vcvt.s32.f32 %v27
    %vm29 = vcmp.eq.s32.totalorder %v25, 4
    %v30 = vsel %vm29, 1, 0
    %v31 = vcvt.s32.f32 %v30
    %v32 = vsub.f32 %v28, %v31
    %v33 = vld [vmem:[#allocation2] sm:$0x1]
    %v34 = vperm.slane %v33, 0
    %v35 = vlaneseq
    %v36 = vshrl.u32 %v35, 7
    %38 = vset.pattern.permute.xlu0 %v36
    %39 = vperm.xlu0 %38, %v34
    %v40 = vpop.permute.xlu0 %39
    %v41 = vlaneseq
    %v42 = vshrl.u32 %v41, 7
    %v43 = vadd.s32 %v42, 8
    %44 = vset.pattern.permute.xlu0 %v43
    %45 = vperm.xlu0 %44, %v34
    %v46 = vpop.permute.xlu0 %45
    %v47 = vlaneseq
    %v48 = vshrl.u32 %v47, 7
    %v49 = vadd.s32 %v48, 16
    %50 = vset.pattern.permute.xlu0 %v49
    %51 = vperm.xlu0 %50, %v34
    %v52 = vpop.permute.xlu0 %51
    %v53 = vlaneseq
    %v54 = vshrl.u32 %v53, 7
    %v55 = vadd.s32 %v54, 24
    %56 = vset.pattern.permute.xlu0 %v55
    %57 = vperm.xlu0 %56, %v34
    %v58 = vpop.permute.xlu0 %57
    %v59 = vlaneseq
    %v60 = vshrl.u32 %v59, 7
    %v61 = vadd.s32 %v60, 32
    %62 = vset.pattern.permute.xlu0 %v61
    %63 = vperm.xlu0 %62, %v34
    %v64 = vpop.permute.xlu0 %63
    %v65 = vlaneseq
    %v66 = vshrl.u32 %v65, 7
    %v67 = vadd.s32 %v66, 40
    %68 = vset.pattern.permute.xlu0 %v67
    %69 = vperm.xlu0 %68, %v34
    %v70 = vpop.permute.xlu0 %69
    %v71 = vlaneseq
    %v72 = vshrl.u32 %v71, 7
    %v73 = vadd.s32 %v72, 48
    %74 = vset.pattern.permute.xlu0 %v73
    %75 = vperm.xlu0 %74, %v34
    %v76 = vpop.permute.xlu0 %75
    %v77 = vlaneseq
    %v78 = vshrl.u32 %v77, 7
    %v79 = vadd.s32 %v78, 56
    %80 = vset.pattern.permute.xlu0 %v79
    %81 = vperm.xlu0 %80, %v34
    %v82 = vpop.permute.xlu0 %81
    %v83 = vlaneseq
    %v84 = vshrl.u32 %v83, 7
    %v85 = vadd.s32 %v84, 64
    %86 = vset.pattern.permute.xlu0 %v85
    %87 = vperm.xlu0 %86, %v34
    %v88 = vpop.permute.xlu0 %87
    %v89 = vlaneseq
    %v90 = vshrl.u32 %v89, 7
    %v91 = vadd.s32 %v90, 72
    %92 = vset.pattern.permute.xlu0 %v91
    %93 = vperm.xlu0 %92, %v34
    %v94 = vpop.permute.xlu0 %93
    %v95 = vlaneseq
    %v96 = vshrl.u32 %v95, 7
    %v97 = vadd.s32 %v96, 80
    %98 = vset.pattern.permute.xlu0 %v97
    %99 = vperm.xlu0 %98, %v34
    %v100 = vpop.permute.xlu0 %99
    %v101 = vlaneseq
    %v102 = vshrl.u32 %v101, 7
    %v103 = vadd.s32 %v102, 88
    %104 = vset.pattern.permute.xlu0 %v103
    %105 = vperm.xlu0 %104, %v34
    %v106 = vpop.permute.xlu0 %105
    %v107 = vlaneseq
    %v108 = vshrl.u32 %v107, 7
    %v109 = vadd.s32 %v108, 96
    %110 = vset.pattern.permute.xlu0 %v109
    %111 = vperm.xlu0 %110, %v34
    %v112 = vpop.permute.xlu0 %111
    %v113 = vlaneseq
    %v114 = vshrl.u32 %v113, 7
    %v115 = vadd.s32 %v114, 104
    %116 = vset.pattern.permute.xlu0 %v115
    %117 = vperm.xlu0 %116, %v34
    %v118 = vpop.permute.xlu0 %117
    %v119 = vlaneseq
    %v120 = vshrl.u32 %v119, 7
    %v121 = vadd.s32 %v120, 112
    %122 = vset.pattern.permute.xlu0 %v121
    %123 = vperm.xlu0 %122, %v34
    %v124 = vpop.permute.xlu0 %123
    %v125 = vlaneseq
    %v126 = vshrl.u32 %v125, 7
    %v127 = vadd.s32 %v126, 120
    %128 = vset.pattern.permute.xlu0 %v127
    %129 = vperm.xlu0 %128, %v34
    %v130 = vpop.permute.xlu0 %129
    %v131 = vmul.f32 %v40, %v32
    %v132 = vmul.f32 %v46, %v32
    %v133 = vmul.f32 %v52, %v32
    %v134 = vmul.f32 %v58, %v32
    %v135 = vmul.f32 %v64, %v32
    %v136 = vmul.f32 %v70, %v32
    %v137 = vmul.f32 %v76, %v32
    %v138 = vmul.f32 %v82, %v32
    %v139 = vmul.f32 %v88, %v32
    %v140 = vmul.f32 %v94, %v32
    %v141 = vmul.f32 %v100, %v32
    %v142 = vmul.f32 %v106, %v32
    %v143 = vmul.f32 %v112, %v32
    %v144 = vmul.f32 %v118, %v32
    %v145 = vmul.f32 %v124, %v32
    %v146 = vmul.f32 %v130, %v32
    %147 = vst [vmem:[#allocation5] sm:$0xff] %v131
    %148 = vst [vmem:[#allocation5 + $0x8] sm:$0xff] %v132
    %149 = vst [vmem:[#allocation5 + $0x10] sm:$0xff] %v133
    %150 = vst [vmem:[#allocation5 + $0x18] sm:$0xff] %v134
    %151 = vst [vmem:[#allocation5 + $0x20] sm:$0xff] %v135
    %152 = vst [vmem:[#allocation5 + $0x28] sm:$0xff] %v136
    %153 = vst [vmem:[#allocation5 + $0x30] sm:$0xff] %v137
    %154 = vst [vmem:[#allocation5 + $0x38] sm:$0xff] %v138
    %155 = vst [vmem:[#allocation5 + $0x40] sm:$0xff] %v139
    %156 = vst [vmem:[#allocation5 + $0x48] sm:$0xff] %v140
    %157 = vst [vmem:[#allocation5 + $0x50] sm:$0xff] %v141
    %158 = vst [vmem:[#allocation5 + $0x58] sm:$0xff] %v142
    %159 = vst [vmem:[#allocation5 + $0x60] sm:$0xff] %v143
    %160 = vst [vmem:[#allocation5 + $0x68] sm:$0xff] %v144
    %161 = vst [vmem:[#allocation5 + $0x70] sm:$0xff] %v145
    %162 = vst [vmem:[#allocation5 + $0x78] sm:$0xff] %v146
    // Predicated region
    $region10: #{tpu_custom_call.1} parent=1 // pred_check
      _
    $region11: #{tpu_custom_call.1} parent=1 // pred_check_branch
      %164 = sbr.rel (0) target = $region13
    $region12: #{tpu_custom_call.1} parent=1 // pred_region
      %166 = vsyncadd [#allocation4], 0
      %s167 = sshll.u32 [#allocation5], 4
      %s168 = int_to_ptr.vmem [resolvable:$true] %s167
      %s169 = sshll.u32 %s1, 4
      %s170 = int_to_ptr.hbm [resolvable:$true] %s169
      %175 = dma.vmem_to_hbm [thread:$0]  %s168, 2048, %s170, [#allocation4], 128, 128, 8
    $region13: #{tpu_custom_call.1} parent=1 // pred_fallthru
      _
    // Predicated region
    $region14: #{tpu_custom_call.1} parent=1 // pred_check
      _
    $region15: #{tpu_custom_call.1} parent=1 // pred_check_branch
      %177 = sbr.rel (0) target = $region17
    $region16: #{tpu_custom_call.1} parent=1 // pred_region
      %179 = dma.done [#allocation4], 2048
    $region17: #{tpu_custom_call.1} parent=1 // pred_fallthru
      _
    %180 = vsyncpa [#allocation3], 1
    %181 = vsyncpa [#allocation4], 1

</llo_original>
